<compile_context>
chip_gen: v7x
topology: tpu7x:2x2x1
jax: 0.10.0
libtpu: 0.0.40
codegen_flags: <defaults>
</compile_context>

<pallas_src>
import jax
import jax.numpy as jnp
from jax.experimental import pallas as pl
from jax.experimental.pallas import tpu as pltpu


# layout: the kernel works on a row-major "pixel matrix" view of the NCHW input:
#   X : (Mg, Cg)            Mg = N*H*W/g rows, each row = g pixels x C_in features
#   W : (Cg, Ncolg)         block-diagonal replication (g blocks) of the
#                           ConvTranspose2d weight with columns ordered (kh,kw,co),
#                           co fastest -> lane-dense output stores
#   B : (1,  Ncolg)         bias tiled across kernel taps and pixel groups (f32)
#   Y : (Mg, Ncolg)         Y[r, j*Ncol + (kh,kw,co)] = out[n, co, i*K+kh, jx*K+kw]
def _upsample_matmul_kernel(x_ref, w_ref, b_ref, o_ref):
    # One MXU matmul per row tile (f32 accumulator) + VPU bias add.
    acc = jnp.dot(x_ref[...], w_ref[...], preferred_element_type=jnp.float32)
    o_ref[...] = (acc + b_ref[...]).astype(o_ref.dtype)


def _round_up(x, m):
    return ((x + m - 1) // m) * m


def _round_down(x, m):
    return max(m, (x // m) * m)


def _tpu_vmem_bytes():
    # Generation-aware physical VMEM (128 MiB on v5e/v6e, 64 MiB per TC on v7x).
    try:
        info = pltpu.get_tpu_info()
        return int(getattr(info, "vmem_capacity_bytes", 64 * 1024 * 1024))
    except Exception:
        return 64 * 1024 * 1024  # conservative fallback (v7x-sized)


def _is_v7x():
    # v7x is the only generation with 2 TensorCores per chip.
    try:
        kind = jax.devices()[0].device_kind.lower()
        return "v7" in kind
    except Exception:
        return False


def _pick_pixel_group(M, C_in, Ncol, bytes_el):
    """Fold g consecutive pixels into one matmul row in the small-channel regime.

    With C_in=4 / Ncol=32 the raw X / Y blocks occupy 4/128 and 32/128 lanes per
    vreg (masked vst.msk stores, ~32x VMEM blow-up on the X tile).  Grouping g
    pixels per row (block-diagonal weight) makes both slabs >=128 lanes wide; the
    extra MXU FLOPs on the zero blocks are free because this regime is DMA-bound.
    """
    if C_in >= 128 and Ncol >= 128:
        return 1
    g = 1
    for cand in (2, 4, 8, 16, 32, 64, 128, 256):
        if M % cand:
            break                      # need a free (M, C) -> (M/g, g*C) reshape
        if cand * C_in > 512:
            break                      # X rows already >= 4 vregs wide
        if (cand * C_in) * (cand * Ncol) * bytes_el > (8 << 20):
            break                      # keep the block-diagonal weight small
        g = cand
        if cand * C_in >= 128 and cand * Ncol >= 128:
            break                      # both X and Y now lane-dense
    return g


def conv_transpose2d_pallas(x, weight, bias, kernel, stride, *,
                            tile_m=512, compute_dtype=None):
    """x: (N, C_in, H, W); weight: (C_in, C_out, K, K); bias: (C_out,). Returns NCHW.

    compute_dtype: optional storage/compute dtype for X, W and Y (e.g. bf16 to
    halve HBM traffic); accumulation and bias stay f32.
    """
    assert kernel == stride, "Upsample kernel assumes kernel_size == stride"
    # TODO(synk): overlapping case (stride < kernel) would need scatter-add.
    N, C_in, H, W = x.shape
    _, C_out, K, _ = weight.shape
    M = N * H * W
    Ncol = K * K * C_out

    compute_dtype = jnp.dtype(compute_dtype) if compute_dtype is not None else x.dtype
    bytes_el = jnp.dtype(compute_dtype).itemsize
    # Sublane alignment of the row tile: 8 (f32), 16 (bf16), 32 (int8/fp8).
    row_align = max(8, 32 // bytes_el)

    # ---- Layout glue (module contract is NCHW in / NCHW out) -----------------
    # Pixel matrix in NHWC order; this pass touches only the *small* input.
    xm = jnp.transpose(x, (0, 2, 3, 1)).reshape(M, C_in)
    # Weight columns ordered (kh, kw, co) with co fastest -> lane-dense stores.
    # TODO(synk): if the op ever turns MXU-bound on v5e at large C_in, pad Ncol to
    # a multiple of 128 here and slice after the call.
    wm = jnp.transpose(weight, (0, 2, 3, 1)).reshape(C_in, Ncol).astype(jnp.float32)
    bm = jnp.tile(bias.astype(jnp.float32), K * K).reshape(1, Ncol)

    # ---- Small-channel lane packing -------------------------------------------
    g = _pick_pixel_group(M, C_in, Ncol, bytes_el)
    Mg, Cg, Ncolg = M // g, g * C_in, g * Ncol
    if g > 1:
        xg = xm.reshape(Mg, Cg)                              # free reshape
        wg = jnp.kron(jnp.eye(g, dtype=jnp.float32), wm)     # block-diagonal weight
        bg = jnp.tile(bm, (1, g))
    else:
        xg, wg, bg = xm, wm, bm
    xg = xg.astype(compute_dtype)
    wg = wg.astype(compute_dtype)
    bg = bg.astype(jnp.float32)          # bias + accumulation stay f32

    # ---- Tile-size selection ---------------------------------------------------
    vmem_phys = _tpu_vmem_bytes()
    vmem_budget = max(24 << 20, int(0.72 * vmem_phys))   # ~92 MiB v5e/v6e, ~46 MiB v7x

    def pipeline_bytes(t):
        # double-buffered X / Y row tiles + single-buffered (Buffered(1)) resident
        # weight and bias blocks.
        return (2 * t * Cg * bytes_el + 2 * t * Ncolg * bytes_el
                + Cg * Ncolg * bytes_el + Ncolg * 4)

    if tile_m >= Mg:
        tm = Mg                                        # one block covers all rows
    else:
        tm = _round_down(tile_m, row_align)
    while tm > row_align and pipeline_bytes(tm) > vmem_budget:
        tm = _round_down(tm // 2, row_align)

    # v7x only: give each of the two TensorCores >= 2 grid steps when the problem
    # is big enough.  On single-TC v5e/v6e shrinking the tile would only lower the
    # HBM-roofline fraction, so it is gated off there.
    if _is_v7x():
        floor = _round_down(max(row_align, 256 // g), row_align)
        if pl.cdiv(Mg, tm) < 4 and Mg >= 4 * floor:
            tm = max(floor, _round_down(pl.cdiv(Mg, 4), row_align))

    # Explicit scoped-VMEM limit (v5e default is only 16 MiB); stay well under the
    # generation's physical VMEM.
    vmem_limit = int(min(max(2 * pipeline_bytes(tm), 32 << 20),
                         int(0.85 * vmem_phys)))

    grid = (pl.cdiv(Mg, tm),)            # no jnp.pad: ragged last block is handled
                                         # by Pallas (OOB writes are dropped).

    cost = pl.CostEstimate(
        flops=2 * Mg * Cg * Ncolg,
        transcendentals=0,
        bytes_accessed=(Mg * Cg + Cg * Ncolg + Mg * Ncolg) * bytes_el + Ncolg * 4,
    )

    def _call(single_buffer_consts):
        const_kwargs = (dict(pipeline_mode=pl.Buffered(1))
                        if single_buffer_consts else {})
        return pl.pallas_call(
            _upsample_matmul_kernel,
            out_shape=jax.ShapeDtypeStruct((Mg, Ncolg), compute_dtype),
            grid_spec=pl.GridSpec(
                grid=grid,
                in_specs=[
                    pl.BlockSpec((tm, Cg), lambda i: (i, 0)),        # pixel-row tile
                    pl.BlockSpec((Cg, Ncolg), lambda i: (0, 0),      # resident weight
                                 **const_kwargs),
                    pl.BlockSpec((1, Ncolg), lambda i: (0, 0),       # resident bias
                                 **const_kwargs),
                ],
                out_specs=pl.BlockSpec((tm, Ncolg), lambda i: (i, 0)),
            ),
            compiler_params=pltpu.CompilerParams(
                dimension_semantics=("parallel",),
                vmem_limit_bytes=vmem_limit,
            ),
            cost_estimate=cost,
        )(xg, wg, bg)

    try:
        yg = _call(True)       # reviewed fast path: single-buffered constants
    except Exception:
        yg = _call(False)      # fallback: default double-buffering (same numerics)

    # ---- Scatter the per-pixel K x K patches back to NCHW ----------------------
    # This is the one remaining full pass over the (large) output; it is the price
    # of the module's NCHW contract (see header note) and would vanish for an
    # NHWC consumer.
    ym = yg.reshape(M, Ncol)                              # undo pixel-group fold (free)
    ym = ym.reshape(N, H, W, K, K, C_out)
    y = jnp.transpose(ym, (0, 5, 1, 3, 2, 4)).reshape(N, C_out, H * K, W * K)
    return y


def conv_transpose2d_ref(x, weight, bias):
    """Plain-JAX reference for ConvTranspose2d with kernel == stride."""
    N, C_in, H, W = x.shape
    C_out, K = weight.shape[1], weight.shape[2]
    y = jnp.einsum('nihw,iokl->nohkwl', x, weight)        # (N,Co,H,K,W,K)
    y = y.reshape(N, C_out, H * K, W * K) + bias[None, :, None, None]
    return y


if __name__ == "__main__":
    # Module config: Upsample(input_dim=4, output_dim=8, kernel=2, stride=2)
    input_dim, output_dim, kernel, stride = 4, 8, 2, 2
    N, H, W = 2, 16, 16

    key = jax.random.PRNGKey(0)
    kx, kw_key, kb = jax.random.split(key, 3)

    x = jax.random.normal(kx, (N, input_dim, H, W), dtype=jnp.float32)
    # ConvTranspose2d weight shape: (in_channels, out_channels, kH, kW)
    fan = input_dim * kernel * kernel
    bound = 1.0 / (fan ** 0.5)
    weight = jax.random.uniform(kw_key, (input_dim, output_dim, kernel, kernel),
                                minval=-bound, maxval=bound, dtype=jnp.float32)
    bias = jax.random.uniform(kb, (output_dim,),
                              minval=-bound, maxval=bound, dtype=jnp.float32)

    y_ref = conv_transpose2d_ref(x, weight, bias)

    # f32 path (module-exact).
    y = conv_transpose2d_pallas(x, weight, bias, kernel, stride)
    y = jax.block_until_ready(y)
    assert y.shape == (N, output_dim, H * stride, W * stride), y.shape
    assert jnp.allclose(y, y_ref, atol=1e-5, rtol=1e-5), "f32 mismatch vs reference"

    # bf16 fast path (halves HBM traffic for X/W/Y; f32 MXU accumulation).
    y_bf16 = conv_transpose2d_pallas(x, weight, bias, kernel, stride,
                                     compute_dtype=jnp.bfloat16)
    y_bf16 = jax.block_until_ready(y_bf16)
    assert jnp.allclose(y_bf16.astype(jnp.float32), y_ref,
                        atol=1e-1, rtol=1e-1), "bf16 mismatch vs reference"

    print("KERNEL_OK")
</pallas_src>

<mosaic_0001>
module attributes {stable_mosaic.version = 11 : i64} {
  func.func @_upsample_matmul_kernel(%arg0: i32, %arg1: memref<16x128xf32, #tpu.memory_space<vmem>>, %arg2: memref<128x1024xf32, #tpu.memory_space<vmem>>, %arg3: memref<1x1024xf32, #tpu.memory_space<vmem>>, %arg4: memref<16x1024xf32, #tpu.memory_space<vmem>>) attributes {dimension_semantics = [#tpu.dimension_semantics<parallel>], iteration_bounds = array<i64: 1>, scalar_prefetch = 0 : i64, scratch_operands = 0 : i64, tpu.core_type = #tpu.core_type<tc>, window_params = [{transform_indices = @transform_0, window_bounds = array<i64: 16, 128>}, {pipeline_mode = #tpu.pipeline_mode<synchronous>, transform_indices = @transform_1, window_bounds = array<i64: 128, 1024>}, {pipeline_mode = #tpu.pipeline_mode<synchronous>, transform_indices = @transform_2, window_bounds = array<i64: 1, 1024>}, {transform_indices = @transform_3, window_bounds = array<i64: 16, 1024>}]} {
    %c0 = arith.constant 0 : index
    %c0_0 = arith.constant 0 : index
    %0 = vector.load %arg1[%c0, %c0_0] : memref<16x128xf32, #tpu.memory_space<vmem>>, vector<16x128xf32>
    %c0_1 = arith.constant 0 : index
    %c0_2 = arith.constant 0 : index
    %1 = vector.load %arg2[%c0_1, %c0_2] : memref<128x1024xf32, #tpu.memory_space<vmem>>, vector<128x1024xf32>
    %cst = arith.constant dense<0.000000e+00> : vector<16x1024xf32>
    %2 = tpu.matmul %0, %1, %cst {dimension_numbers = #tpu.dot_dimension_numbers<[1], [0], [0], [1], [0, 0, 1, 1], [], []>} : vector<16x128xf32>, vector<128x1024xf32>, vector<16x1024xf32> -> vector<16x1024xf32>
    %c0_3 = arith.constant 0 : index
    %c0_4 = arith.constant 0 : index
    %3 = vector.load %arg3[%c0_3, %c0_4] : memref<1x1024xf32, #tpu.memory_space<vmem>>, vector<1x1024xf32>
    %4 = vector.broadcast %3 : vector<1x1024xf32> to vector<16x1024xf32>
    %5 = arith.addf %2, %4 : vector<16x1024xf32>
    %c0_5 = arith.constant 0 : index
    %c0_6 = arith.constant 0 : index
    %6 = vector.load %arg4[%c0_5, %c0_6] : memref<16x1024xf32, #tpu.memory_space<vmem>>, vector<16x1024xf32>
    tpu.vector_store %arg4[%c0_5, %c0_6], %5 {strides = array<i32>} : memref<16x1024xf32, #tpu.memory_space<vmem>>, vector<16x1024xf32>,
    return
  }
  func.func @transform_0(%arg0: i32) -> (i32, i32) {
    %c0_i32 = arith.constant 0 : i32
    %c0_i32_0 = arith.constant 0 : i32
    return %arg0, %c0_i32 : i32, i32
  }
  func.func @transform_1(%arg0: i32) -> (i32, i32) {
    %c0_i32 = arith.constant 0 : i32
    %c0_i32_0 = arith.constant 0 : i32
    %c0_i32_1 = arith.constant 0 : i32
    return %c0_i32, %c0_i32_0 : i32, i32
  }
  func.func @transform_2(%arg0: i32) -> (i32, i32) {
    %c0_i32 = arith.constant 0 : i32
    %c0_i32_0 = arith.constant 0 : i32
    %c0_i32_1 = arith.constant 0 : i32
    return %c0_i32, %c0_i32_0 : i32, i32
  }
  func.func @transform_3(%arg0: i32) -> (i32, i32) {
    %c0_i32 = arith.constant 0 : i32
    %c0_i32_0 = arith.constant 0 : i32
    return %arg0, %c0_i32 : i32, i32
  }
}

module attributes {stable_mosaic.version = 11 : i64} {
  func.func @_upsample_matmul_kernel(%arg0: i32, %arg1: memref<16x128xf32, #tpu.memory_space<vmem>>, %arg2: memref<128x1024xf32, #tpu.memory_space<vmem>>, %arg3: memref<1x1024xf32, #tpu.memory_space<vmem>>, %arg4: memref<16x1024xf32, #tpu.memory_space<vmem>>) attributes {dimension_semantics = [#tpu.dimension_semantics<parallel>], iteration_bounds = array<i64: 1>, scalar_prefetch = 0 : i64, scratch_operands = 0 : i64, tpu.core_type = #tpu.core_type<tc>, window_params = [{transform_indices = @transform_0, window_bounds = array<i64: 16, 128>}, {pipeline_mode = #tpu.pipeline_mode<synchronous>, transform_indices = @transform_1, window_bounds = array<i64: 128, 1024>}, {pipeline_mode = #tpu.pipeline_mode<synchronous>, transform_indices = @transform_2, window_bounds = array<i64: 1, 1024>}, {transform_indices = @transform_3, window_bounds = array<i64: 16, 1024>}]} {
    %c0 = arith.constant 0 : index
    %c0_0 = arith.constant 0 : index
    %0 = vector.load %arg1[%c0, %c0_0] : memref<16x128xf32, #tpu.memory_space<vmem>>, vector<16x128xf32>
    %c0_1 = arith.constant 0 : index
    %c0_2 = arith.constant 0 : index
    %1 = vector.load %arg2[%c0_1, %c0_2] : memref<128x1024xf32, #tpu.memory_space<vmem>>, vector<128x1024xf32>
    %cst = arith.constant dense<0.000000e+00> : vector<16x1024xf32>
    %2 = tpu.matmul %0, %1, %cst {dimension_numbers = #tpu.dot_dimension_numbers<[1], [0], [0], [1], [0, 0, 1, 1], [], []>} : vector<16x128xf32>, vector<128x1024xf32>, vector<16x1024xf32> -> vector<16x1024xf32>
    %c0_3 = arith.constant 0 : index
    %c0_4 = arith.constant 0 : index
    %3 = vector.load %arg3[%c0_3, %c0_4] : memref<1x1024xf32, #tpu.memory_space<vmem>>, vector<1x1024xf32>
    %4 = vector.broadcast %3 : vector<1x1024xf32> to vector<16x1024xf32>
    %5 = arith.addf %2, %4 : vector<16x1024xf32>
    %c0_5 = arith.constant 0 : index
    %c0_6 = arith.constant 0 : index
    %6 = vector.load %arg4[%c0_5, %c0_6] : memref<16x1024xf32, #tpu.memory_space<vmem>>, vector<16x1024xf32>
    tpu.vector_store %arg4[%c0_5, %c0_6], %5 {strides = array<i32>} : memref<16x1024xf32, #tpu.memory_space<vmem>>, vector<16x1024xf32>,
    return
  }
  func.func @transform_0(%arg0: i32) -> (i32, i32) {
    %c0_i32 = arith.constant 0 : i32
    %c0_i32_0 = arith.constant 0 : i32
    return %arg0, %c0_i32 : i32, i32
  }
  func.func @transform_1(%arg0: i32) -> (i32, i32) {
    %c0_i32 = arith.constant 0 : i32
    %c0_i32_0 = arith.constant 0 : i32
    %c0_i32_1 = arith.constant 0 : i32
    return %c0_i32, %c0_i32_0 : i32, i32
  }
  func.func @transform_2(%arg0: i32) -> (i32, i32) {
    %c0_i32 = arith.constant 0 : i32
    %c0_i32_0 = arith.constant 0 : i32
    %c0_i32_1 = arith.constant 0 : i32
    return %c0_i32, %c0_i32_0 : i32, i32
  }
  func.func @transform_3(%arg0: i32) -> (i32, i32) {
    %c0_i32 = arith.constant 0 : i32
    %c0_i32_0 = arith.constant 0 : i32
    return %arg0, %c0_i32 : i32, i32
  }
}

</mosaic_0001>

<llo_original>
// kernel: tpu_custom_call.1
$region0: #{tpu_custom_call.1}
  #allocation0 [shape = 'u32[]', space=smem, size = 0x4, offset = 0x4, fixed_abs, tag = 'smem constant byte address 0x4 - core index']
  #allocation1 [shape = 'u32[144,128]{1,0:T(1,128)}', space=vmem, size = 0x12000, scoped, tag = 'internal scratch']
  %s0 = inlined_call_operand.hbm [shape: f32[16,128], index: 0, kind: input, shape index: {}]
  %s1 = inlined_call_operand.hbm [shape: f32[128,1024], index: 1, kind: input, shape index: {}]
  %s2 = inlined_call_operand.hbm [shape: f32[1,1024], index: 2, kind: input, shape index: {}]
  %s3 = inlined_call_operand.hbm [shape: f32[16,1024], index: 3, kind: output, shape index: {}]
  %s4 = sld [smem:[#allocation0]]
  $region34: #{tpu_custom_call.1} parent=0
    _
  %s6 = ssub.s32 1, %s4
  %s7 = scalar_select 0, %s6, %s4
  $region1: #{tpu_custom_call.1} parent=0
    #allocation2 [shape = 'u8[8192]{0}', space=vmem, size = 0x2000, scoped, tag = 'input window, operand 0, single buffered']
    #allocation3 [shape = 's32[1]{0}', space=sflag, size = 0x4, scoped, tag = 'scoped memory for tpu_custom_call.1']
    #allocation4 [shape = 's32[1]{0}', space=sflag, size = 0x4, scoped, tag = 'scoped memory for tpu_custom_call.1']
    #allocation5 [shape = 'u8[524288]{0}', space=vmem, size = 0x80000, scoped, tag = 'input window, operand 1, single buffered']
    #allocation6 [shape = 's32[1]{0}', space=sflag, size = 0x4, scoped, tag = 'scoped memory for tpu_custom_call.1']
    #allocation7 [shape = 'u8[4096]{0}', space=vmem, size = 0x1000, scoped, tag = 'input window, operand 2, single buffered']
    #allocation8 [shape = 'u8[65536]{0}', space=vmem, size = 0x10000, scoped, tag = 'output window, operand 0, single buffered']
    %8 = vsyncpa [#allocation3], 0
    %9 = vsyncpa [#allocation6], 0
    %10 = vsyncpa [#allocation4], 0
    // Predicated region
    $region2: #{tpu_custom_call.1} parent=1 // pred_check
      _
    $region3: #{tpu_custom_call.1} parent=1 // pred_check_branch
      %12 = sbr.rel (0) target = $region5
    $region4: #{tpu_custom_call.1} parent=1 // pred_region
      %s14 = ssub.s32 256, 256
      %15 = vsyncadd [#allocation3], %s14
      %s16 = sshll.u32 [#allocation2], 4
      %s17 = int_to_ptr.vmem [resolvable:$true] %s16
      %22 = dma.hbm_to_vmem [thread:$0]  %s0, 256, %s17, [#allocation3], 128, 128, 8
    $region5: #{tpu_custom_call.1} parent=1 // pred_fallthru
      _
    // Predicated region
    $region6: #{tpu_custom_call.1} parent=1 // pred_check
      _
    $region7: #{tpu_custom_call.1} parent=1 // pred_check_branch
      %24 = sbr.rel (0) target = $region9
    $region8: #{tpu_custom_call.1} parent=1 // pred_region
      %s26 = ssub.s32 16384, 16384
      %27 = vsyncadd [#allocation6], %s26
      %s28 = sshll.u32 [#allocation5], 4
      %s29 = int_to_ptr.vmem [resolvable:$true] %s28
      %34 = dma.hbm_to_vmem [thread:$0]  %s1, 16384, %s29, [#allocation6], 1024, 1024, 64
    $region9: #{tpu_custom_call.1} parent=1 // pred_fallthru
      _
    // Predicated region
    $region10: #{tpu_custom_call.1} parent=1 // pred_check
      _
    $region11: #{tpu_custom_call.1} parent=1 // pred_check_branch
      %36 = sbr.rel (0) target = $region13
    $region12: #{tpu_custom_call.1} parent=1 // pred_region
      %s38 = ssub.s32 128, 128
      %39 = vsyncadd [#allocation6], %s38
      %s41 = sshll.u32 [#allocation7], 4
      %s42 = int_to_ptr.vmem [resolvable:$true] %s41
      %44 = dma.hbm_to_vmem [thread:$0]  %s2, 128, %s42, [#allocation6]
    $region13: #{tpu_custom_call.1} parent=1 // pred_fallthru
      _
    // Predicated region
    $region14: #{tpu_custom_call.1} parent=1 // pred_check
      _
    $region15: #{tpu_custom_call.1} parent=1 // pred_check_branch
      %46 = sbr.rel (0) target = $region17
    $region16: #{tpu_custom_call.1} parent=1 // pred_region
      %47 = dma.done [#allocation3], 256
    $region17: #{tpu_custom_call.1} parent=1 // pred_fallthru
      _
    // Predicated region
    $region18: #{tpu_custom_call.1} parent=1 // pred_check
      _
    $region19: #{tpu_custom_call.1} parent=1 // pred_check_branch
      %49 = sbr.rel (0) target = $region21
    $region20: #{tpu_custom_call.1} parent=1 // pred_region
      %50 = dma.done [#allocation6], 16384
    $region21: #{tpu_custom_call.1} parent=1 // pred_fallthru
      _
    // Predicated region
    $region22: #{tpu_custom_call.1} parent=1 // pred_check
      _
    $region23: #{tpu_custom_call.1} parent=1 // pred_check_branch
      %52 = sbr.rel (0) target = $region25
    $region24: #{tpu_custom_call.1} parent=1 // pred_region
      %53 = dma.done [#allocation6], 128
    $region25: #{tpu_custom_call.1} parent=1 // pred_fallthru
      _
    %v54 = vld [vmem:[#allocation2] sm:$0xff]
    %v55 = vld [vmem:[#allocation2 + $0x8] sm:$0xff]
    %v56 = vld [vmem:[#allocation5] sm:$0xff]
    %v57 = vld [vmem:[#allocation5 + $0x8] sm:$0xff]
    %v58 = vld [vmem:[#allocation5 + $0x10] sm:$0xff]
    %v59 = vld [vmem:[#allocation5 + $0x18] sm:$0xff]
    %v60 = vld [vmem:[#allocation5 + $0x20] sm:$0xff]
    %v61 = vld [vmem:[#allocation5 + $0x28] sm:$0xff]
    %v62 = vld [vmem:[#allocation5 + $0x30] sm:$0xff]
    %v63 = vld [vmem:[#allocation5 + $0x38] sm:$0xff]
    %v64 = vld [vmem:[#allocation5 + $0x40] sm:$0xff]
    %v65 = vld [vmem:[#allocation5 + $0x48] sm:$0xff]
    %v66 = vld [vmem:[#allocation5 + $0x50] sm:$0xff]
    %v67 = vld [vmem:[#allocation5 + $0x58] sm:$0xff]
    %v68 = vld [vmem:[#allocation5 + $0x60] sm:$0xff]
    %v69 = vld [vmem:[#allocation5 + $0x68] sm:$0xff]
    %v70 = vld [vmem:[#allocation5 + $0x70] sm:$0xff]
    %v71 = vld [vmem:[#allocation5 + $0x78] sm:$0xff]
    %v72 = vld [vmem:[#allocation5 + $0x80] sm:$0xff]
    %v73 = vld [vmem:[#allocation5 + $0x88] sm:$0xff]
    %v74 = vld [vmem:[#allocation5 + $0x90] sm:$0xff]
    %v75 = vld [vmem:[#allocation5 + $0x98] sm:$0xff]
    %v76 = vld [vmem:[#allocation5 + $0xa0] sm:$0xff]
    %v77 = vld [vmem:[#allocation5 + $0xa8] sm:$0xff]
    %v78 = vld [vmem:[#allocation5 + $0xb0] sm:$0xff]
    %v79 = vld [vmem:[#allocation5 + $0xb8] sm:$0xff]
    %v80 = vld [vmem:[#allocation5 + $0xc0] sm:$0xff]
    %v81 = vld [vmem:[#allocation5 + $0xc8] sm:$0xff]
    %v82 = vld [vmem:[#allocation5 + $0xd0] sm:$0xff]
    %v83 = vld [vmem:[#allocation5 + $0xd8] sm:$0xff]
    %v84 = vld [vmem:[#allocation5 + $0xe0] sm:$0xff]
    %v85 = vld [vmem:[#allocation5 + $0xe8] sm:$0xff]
    %v86 = vld [vmem:[#allocation5 + $0xf0] sm:$0xff]
    %v87 = vld [vmem:[#allocation5 + $0xf8] sm:$0xff]
    %v88 = vld [vmem:[#allocation5 + $0x100] sm:$0xff]
    %v89 = vld [vmem:[#allocation5 + $0x108] sm:$0xff]
    %v90 = vld [vmem:[#allocation5 + $0x110] sm:$0xff]
    %v91 = vld [vmem:[#allocation5 + $0x118] sm:$0xff]
    %v92 = vld [vmem:[#allocation5 + $0x120] sm:$0xff]
    %v93 = vld [vmem:[#allocation5 + $0x128] sm:$0xff]
    %v94 = vld [vmem:[#allocation5 + $0x130] sm:$0xff]
    %v95 = vld [vmem:[#allocation5 + $0x138] sm:$0xff]
    %v96 = vld [vmem:[#allocation5 + $0x140] sm:$0xff]
    %v97 = vld [vmem:[#allocation5 + $0x148] sm:$0xff]
    %v98 = vld [vmem:[#allocation5 + $0x150] sm:$0xff]
    %v99 = vld [vmem:[#allocation5 + $0x158] sm:$0xff]
    %v100 = vld [vmem:[#allocation5 + $0x160] sm:$0xff]
    %v101 = vld [vmem:[#allocation5 + $0x168] sm:$0xff]
    %v102 = vld [vmem:[#allocation5 + $0x170] sm:$0xff]
    %v103 = vld [vmem:[#allocation5 + $0x178] sm:$0xff]
    %v104 = vld [vmem:[#allocation5 + $0x180] sm:$0xff]
    %v105 = vld [vmem:[#allocation5 + $0x188] sm:$0xff]
    %v106 = vld [vmem:[#allocation5 + $0x190] sm:$0xff]
    %v107 = vld [vmem:[#allocation5 + $0x198] sm:$0xff]
    %v108 = vld [vmem:[#allocation5 + $0x1a0] sm:$0xff]
    %v109 = vld [vmem:[#allocation5 + $0x1a8] sm:$0xff]
    %v110 = vld [vmem:[#allocation5 + $0x1b0] sm:$0xff]
    %v111 = vld [vmem:[#allocation5 + $0x1b8] sm:$0xff]
    %v112 = vld [vmem:[#allocation5 + $0x1c0] sm:$0xff]
    %v113 = vld [vmem:[#allocation5 + $0x1c8] sm:$0xff]
    %v114 = vld [vmem:[#allocation5 + $0x1d0] sm:$0xff]
    %v115 = vld [vmem:[#allocation5 + $0x1d8] sm:$0xff]
    %v116 = vld [vmem:[#allocation5 + $0x1e0] sm:$0xff]
    %v117 = vld [vmem:[#allocation5 + $0x1e8] sm:$0xff]
    %v118 = vld [vmem:[#allocation5 + $0x1f0] sm:$0xff]
    %v119 = vld [vmem:[#allocation5 + $0x1f8] sm:$0xff]
    %v120 = vld [vmem:[#allocation5 + $0x200] sm:$0xff]
    %v121 = vld [vmem:[#allocation5 + $0x208] sm:$0xff]
    %v122 = vld [vmem:[#allocation5 + $0x210] sm:$0xff]
    %v123 = vld [vmem:[#allocation5 + $0x218] sm:$0xff]
    %v124 = vld [vmem:[#allocation5 + $0x220] sm:$0xff]
    %v125 = vld [vmem:[#allocation5 + $0x228] sm:$0xff]
    %v126 = vld [vmem:[#allocation5 + $0x230] sm:$0xff]
    %v127 = vld [vmem:[#allocation5 + $0x238] sm:$0xff]
    %v128 = vld [vmem:[#allocation5 + $0x240] sm:$0xff]
    %v129 = vld [vmem:[#allocation5 + $0x248] sm:$0xff]
    %v130 = vld [vmem:[#allocation5 + $0x250] sm:$0xff]
    %v131 = vld [vmem:[#allocation5 + $0x258] sm:$0xff]
    %v132 = vld [vmem:[#allocation5 + $0x260] sm:$0xff]
    %v133 = vld [vmem:[#allocation5 + $0x268] sm:$0xff]
    %v134 = vld [vmem:[#allocation5 + $0x270] sm:$0xff]
    %v135 = vld [vmem:[#allocation5 + $0x278] sm:$0xff]
    %v136 = vld [vmem:[#allocation5 + $0x280] sm:$0xff]
    %v137 = vld [vmem:[#allocation5 + $0x288] sm:$0xff]
    %v138 = vld [vmem:[#allocation5 + $0x290] sm:$0xff]
    %v139 = vld [vmem:[#allocation5 + $0x298] sm:$0xff]
    %v140 = vld [vmem:[#allocation5 + $0x2a0] sm:$0xff]
    %v141 = vld [vmem:[#allocation5 + $0x2a8] sm:$0xff]
    %v142 = vld [vmem:[#allocation5 + $0x2b0] sm:$0xff]
    %v143 = vld [vmem:[#allocation5 + $0x2b8] sm:$0xff]
    %v144 = vld [vmem:[#allocation5 + $0x2c0] sm:$0xff]
    %v145 = vld [vmem:[#allocation5 + $0x2c8] sm:$0xff]
    %v146 = vld [vmem:[#allocation5 + $0x2d0] sm:$0xff]
    %v147 = vld [vmem:[#allocation5 + $0x2d8] sm:$0xff]
    %v148 = vld [vmem:[#allocation5 + $0x2e0] sm:$0xff]
    %v149 = vld [vmem:[#allocation5 + $0x2e8] sm:$0xff]
    %v150 = vld [vmem:[#allocation5 + $0x2f0] sm:$0xff]
    %v151 = vld [vmem:[#allocation5 + $0x2f8] sm:$0xff]
    %v152 = vld [vmem:[#allocation5 + $0x300] sm:$0xff]
    %v153 = vld [vmem:[#allocation5 + $0x308] sm:$0xff]
    %v154 = vld [vmem:[#allocation5 + $0x310] sm:$0xff]
    %v155 = vld [vmem:[#allocation5 + $0x318] sm:$0xff]
    %v156 = vld [vmem:[#allocation5 + $0x320] sm:$0xff]
    %v157 = vld [vmem:[#allocation5 + $0x328] sm:$0xff]
    %v158 = vld [vmem:[#allocation5 + $0x330] sm:$0xff]
    %v159 = vld [vmem:[#allocation5 + $0x338] sm:$0xff]
    %v160 = vld [vmem:[#allocation5 + $0x340] sm:$0xff]
    %v161 = vld [vmem:[#allocation5 + $0x348] sm:$0xff]
    %v162 = vld [vmem:[#allocation5 + $0x350] sm:$0xff]
    %v163 = vld [vmem:[#allocation5 + $0x358] sm:$0xff]
    %v164 = vld [vmem:[#allocation5 + $0x360] sm:$0xff]
    %v165 = vld [vmem:[#allocation5 + $0x368] sm:$0xff]
    %v166 = vld [vmem:[#allocation5 + $0x370] sm:$0xff]
    %v167 = vld [vmem:[#allocation5 + $0x378] sm:$0xff]
    %v168 = vld [vmem:[#allocation5 + $0x380] sm:$0xff]
    %v169 = vld [vmem:[#allocation5 + $0x388] sm:$0xff]
    %v170 = vld [vmem:[#allocation5 + $0x390] sm:$0xff]
    %v171 = vld [vmem:[#allocation5 + $0x398] sm:$0xff]
    %v172 = vld [vmem:[#allocation5 + $0x3a0] sm:$0xff]
    %v173 = vld [vmem:[#allocation5 + $0x3a8] sm:$0xff]
    %v174 = vld [vmem:[#allocation5 + $0x3b0] sm:$0xff]
    %v175 = vld [vmem:[#allocation5 + $0x3b8] sm:$0xff]
    %v176 = vld [vmem:[#allocation5 + $0x3c0] sm:$0xff]
    %v177 = vld [vmem:[#allocation5 + $0x3c8] sm:$0xff]
    %v178 = vld [vmem:[#allocation5 + $0x3d0] sm:$0xff]
    %v179 = vld [vmem:[#allocation5 + $0x3d8] sm:$0xff]
    %v180 = vld [vmem:[#allocation5 + $0x3e0] sm:$0xff]
    %v181 = vld [vmem:[#allocation5 + $0x3e8] sm:$0xff]
    %v182 = vld [vmem:[#allocation5 + $0x3f0] sm:$0xff]
    %v183 = vld [vmem:[#allocation5 + $0x3f8] sm:$0xff]
    %v184 = vld [vmem:[#allocation7] sm:$0xff]
    %v186 = vlaneseq
    %v187 = vshrl.u32 %v186, 7
    %v188 = vsub.s32 0, %v187
    %v189 = vrot.slane %v184, %v188
    %v190 = vlaneseq
    %v191 = vshrl.u32 %v190, 7
    %v192 = vsub.s32 1, %v191
    %v193 = vrot.slane %v184, %v192
    %v194 = vlaneseq
    %v195 = vshrl.u32 %v194, 7
    %v196 = vsub.s32 2, %v195
    %v197 = vrot.slane %v184, %v196
    %v198 = vlaneseq
    %v199 = vshrl.u32 %v198, 7
    %v200 = vsub.s32 3, %v199
    %v201 = vrot.slane %v184, %v200
    %v202 = vlaneseq
    %v203 = vshrl.u32 %v202, 7
    %v204 = vsub.s32 4, %v203
    %v205 = vrot.slane %v184, %v204
    %v206 = vlaneseq
    %v207 = vshrl.u32 %v206, 7
    %v208 = vsub.s32 5, %v207
    %v209 = vrot.slane %v184, %v208
    %v210 = vlaneseq
    %v211 = vshrl.u32 %v210, 7
    %v212 = vsub.s32 6, %v211
    %v213 = vrot.slane %v184, %v212
    %v214 = vlaneseq
    %v215 = vshrl.u32 %v214, 7
    %v216 = vsub.s32 7, %v215
    %v217 = vrot.slane %v184, %v216
    %226 = vmatprep.subr.mxu0 %v57
    %227 = vmatpush1.msra.mxu0 %v56
    %228 = vmatprep.subr.mxu0 %v65
    %229 = vmatpush1.msra.mxu0 %v64
    %230 = vmatprep.subr.mxu0 %v73
    %231 = vmatpush1.msra.mxu0 %v72
    %232 = vmatprep.subr.mxu0 %v81
    %233 = vmatpush1.msra.mxu0 %v80
    %234 = vmatprep.subr.mxu0 %v89
    %235 = vmatpush1.msra.mxu0 %v88
    %236 = vmatprep.subr.mxu0 %v97
    %237 = vmatpush1.msra.mxu0 %v96
    %238 = vmatprep.subr.mxu0 %v105
    %239 = vmatpush1.msra.mxu0 %v104
    %240 = vmatprep.subr.mxu0 %v113
    %241 = vmatpush1.msra.mxu0 %v112
    %242 = vmatprep.subr.mxu0 %v121
    %243 = vmatpush1.msra.mxu0 %v120
    %244 = vmatprep.subr.mxu0 %v129
    %245 = vmatpush1.msra.mxu0 %v128
    %246 = vmatprep.subr.mxu0 %v137
    %247 = vmatpush1.msra.mxu0 %v136
    %248 = vmatprep.subr.mxu0 %v145
    %249 = vmatpush1.msra.mxu0 %v144
    %250 = vmatprep.subr.mxu0 %v153
    %251 = vmatpush1.msra.mxu0 %v152
    %252 = vmatprep.subr.mxu0 %v161
    %253 = vmatpush1.msra.mxu0 %v160
    %254 = vmatprep.subr.mxu0 %v169
    %255 = vmatpush1.msra.mxu0 %v168
    %256 = vmatprep.subr.mxu0 %v177
    %257 = vmatpush1.msra.mxu0 %v176
    %258 = vmatprep.subr.mxu0 0.0
    %259 = vmatpush1.msra.mxu0 0.0
    %260 = vmatprep.subr.mxu0 0.0
    %261 = vmatpush1.msra.mxu0 0.0
    %262 = vmatprep.subr.mxu0 0.0
    %263 = vmatpush1.msra.mxu0 0.0
    %264 = vmatprep.subr.mxu0 0.0
    %265 = vmatpush1.msra.mxu0 0.0
    %266 = vmatprep.subr.mxu0 0.0
    %267 = vmatpush1.msra.mxu0 0.0
    %268 = vmatprep.subr.mxu0 0.0
    %269 = vmatpush1.msra.mxu0 0.0
    %270 = vmatprep.subr.mxu0 0.0
    %271 = vmatpush1.msra.mxu0 0.0
    %272 = vmatprep.subr.mxu0 0.0
    %273 = vmatpush1.msra.mxu0 0.0
    %274 = vmatprep.subr.mxu0 0.0
    %275 = vmatpush1.msra.mxu0 0.0
    %276 = vmatprep.subr.mxu0 0.0
    %277 = vmatpush1.msra.mxu0 0.0
    %278 = vmatprep.subr.mxu0 0.0
    %279 = vmatpush1.msra.mxu0 0.0
    %280 = vmatprep.subr.mxu0 0.0
    %281 = vmatpush1.msra.mxu0 0.0
    %282 = vmatprep.subr.mxu0 0.0
    %283 = vmatpush1.msra.mxu0 0.0
    %284 = vmatprep.subr.mxu0 0.0
    %285 = vmatpush1.msra.mxu0 0.0
    %286 = vmatprep.subr.mxu0 0.0
    %287 = vmatpush1.msra.mxu0 0.0
    %288 = vmatprep.subr.mxu0 0.0
    %289 = vmatpush1.msra.mxu0 0.0
    %290 = vmatprep.mubr.f32.mxu0 0.0
    %291 = vmatmul.mubr.f32.gmra.mrb[0].mxu0 %v54
    %v292 = vpop.f32.mrb[0].mxu0
    %v293 = vadd.f32 %v189, %v292
    %v294 = vpop.f32.mrb[0].mxu0
    %v295 = vadd.f32 %v193, %v294
    %296 = vmatprep.mubr.f32.mxu0 0.0
    %297 = vmatmul.mubr.f32.gmra.mrb[0].mxu0 %v55
    %v298 = vpop.f32.mrb[0].mxu0
    %v299 = vadd.f32 %v189, %v298
    %v300 = vpop.f32.mrb[0].mxu0
    %v301 = vadd.f32 %v193, %v300
    %302 = vdwg.mxu0
    %303 = vmatprep.subr.mxu0 %v59
    %304 = vmatpush1.msra.mxu0 %v58
    %305 = vmatprep.subr.mxu0 %v67
    %306 = vmatpush1.msra.mxu0 %v66
    %307 = vmatprep.subr.mxu0 %v75
    %308 = vmatpush1.msra.mxu0 %v74
    %309 = vmatprep.subr.mxu0 %v83
    %310 = vmatpush1.msra.mxu0 %v82
    %311 = vmatprep.subr.mxu0 %v91
    %312 = vmatpush1.msra.mxu0 %v90
    %313 = vmatprep.subr.mxu0 %v99
    %314 = vmatpush1.msra.mxu0 %v98
    %315 = vmatprep.subr.mxu0 %v107
    %316 = vmatpush1.msra.mxu0 %v106
    %317 = vmatprep.subr.mxu0 %v115
    %318 = vmatpush1.msra.mxu0 %v114
    %319 = vmatprep.subr.mxu0 %v123
    %320 = vmatpush1.msra.mxu0 %v122
    %321 = vmatprep.subr.mxu0 %v131
    %322 = vmatpush1.msra.mxu0 %v130
    %323 = vmatprep.subr.mxu0 %v139
    %324 = vmatpush1.msra.mxu0 %v138
    %325 = vmatprep.subr.mxu0 %v147
    %326 = vmatpush1.msra.mxu0 %v146
    %327 = vmatprep.subr.mxu0 %v155
    %328 = vmatpush1.msra.mxu0 %v154
    %329 = vmatprep.subr.mxu0 %v163
    %330 = vmatpush1.msra.mxu0 %v162
    %331 = vmatprep.subr.mxu0 %v171
    %332 = vmatpush1.msra.mxu0 %v170
    %333 = vmatprep.subr.mxu0 %v179
    %334 = vmatpush1.msra.mxu0 %v178
    %335 = vmatprep.subr.mxu0 0.0
    %336 = vmatpush1.msra.mxu0 0.0
    %337 = vmatprep.subr.mxu0 0.0
    %338 = vmatpush1.msra.mxu0 0.0
    %339 = vmatprep.subr.mxu0 0.0
    %340 = vmatpush1.msra.mxu0 0.0
    %341 = vmatprep.subr.mxu0 0.0
    %342 = vmatpush1.msra.mxu0 0.0
    %343 = vmatprep.subr.mxu0 0.0
    %344 = vmatpush1.msra.mxu0 0.0
    %345 = vmatprep.subr.mxu0 0.0
    %346 = vmatpush1.msra.mxu0 0.0
    %347 = vmatprep.subr.mxu0 0.0
    %348 = vmatpush1.msra.mxu0 0.0
    %349 = vmatprep.subr.mxu0 0.0
    %350 = vmatpush1.msra.mxu0 0.0
    %351 = vmatprep.subr.mxu0 0.0
    %352 = vmatpush1.msra.mxu0 0.0
    %353 = vmatprep.subr.mxu0 0.0
    %354 = vmatpush1.msra.mxu0 0.0
    %355 = vmatprep.subr.mxu0 0.0
    %356 = vmatpush1.msra.mxu0 0.0
    %357 = vmatprep.subr.mxu0 0.0
    %358 = vmatpush1.msra.mxu0 0.0
    %359 = vmatprep.subr.mxu0 0.0
    %360 = vmatpush1.msra.mxu0 0.0
    %361 = vmatprep.subr.mxu0 0.0
    %362 = vmatpush1.msra.mxu0 0.0
    %363 = vmatprep.subr.mxu0 0.0
    %364 = vmatpush1.msra.mxu0 0.0
    %365 = vmatprep.subr.mxu0 0.0
    %366 = vmatpush1.msra.mxu0 0.0
    %367 = vmatprep.mubr.f32.mxu0 0.0
    %368 = vmatmul.mubr.f32.gmra.mrb[0].mxu0 %v54
    %v369 = vpop.f32.mrb[0].mxu0
    %v370 = vadd.f32 %v197, %v369
    %v371 = vpop.f32.mrb[0].mxu0
    %v372 = vadd.f32 %v201, %v371
    %373 = vmatprep.mubr.f32.mxu0 0.0
    %374 = vmatmul.mubr.f32.gmra.mrb[0].mxu0 %v55
    %v375 = vpop.f32.mrb[0].mxu0
    %v376 = vadd.f32 %v197, %v375
    %v377 = vpop.f32.mrb[0].mxu0
    %v378 = vadd.f32 %v201, %v377
    %379 = vdwg.mxu0
    %380 = vmatprep.subr.mxu0 %v61
    %381 = vmatpush1.msra.mxu0 %v60
    %382 = vmatprep.subr.mxu0 %v69
    %383 = vmatpush1.msra.mxu0 %v68
    %384 = vmatprep.subr.mxu0 %v77
    %385 = vmatpush1.msra.mxu0 %v76
    %386 = vmatprep.subr.mxu0 %v85
    %387 = vmatpush1.msra.mxu0 %v84
    %388 = vmatprep.subr.mxu0 %v93
    %389 = vmatpush1.msra.mxu0 %v92
    %390 = vmatprep.subr.mxu0 %v101
    %391 = vmatpush1.msra.mxu0 %v100
    %392 = vmatprep.subr.mxu0 %v109
    %393 = vmatpush1.msra.mxu0 %v108
    %394 = vmatprep.subr.mxu0 %v117
    %395 = vmatpush1.msra.mxu0 %v116
    %396 = vmatprep.subr.mxu0 %v125
    %397 = vmatpush1.msra.mxu0 %v124
    %398 = vmatprep.subr.mxu0 %v133
    %399 = vmatpush1.msra.mxu0 %v132
    %400 = vmatprep.subr.mxu0 %v141
    %401 = vmatpush1.msra.mxu0 %v140
    %402 = vmatprep.subr.mxu0 %v149
    %403 = vmatpush1.msra.mxu0 %v148
    %404 = vmatprep.subr.mxu0 %v157
    %405 = vmatpush1.msra.mxu0 %v156
    %406 = vmatprep.subr.mxu0 %v165
    %407 = vmatpush1.msra.mxu0 %v164
    %408 = vmatprep.subr.mxu0 %v173
    %409 = vmatpush1.msra.mxu0 %v172
    %410 = vmatprep.subr.mxu0 %v181
    %411 = vmatpush1.msra.mxu0 %v180
    %412 = vmatprep.subr.mxu0 0.0
    %413 = vmatpush1.msra.mxu0 0.0
    %414 = vmatprep.subr.mxu0 0.0
    %415 = vmatpush1.msra.mxu0 0.0
    %416 = vmatprep.subr.mxu0 0.0
    %417 = vmatpush1.msra.mxu0 0.0
    %418 = vmatprep.subr.mxu0 0.0
    %419 = vmatpush1.msra.mxu0 0.0
    %420 = vmatprep.subr.mxu0 0.0
    %421 = vmatpush1.msra.mxu0 0.0
    %422 = vmatprep.subr.mxu0 0.0
    %423 = vmatpush1.msra.mxu0 0.0
    %424 = vmatprep.subr.mxu0 0.0
    %425 = vmatpush1.msra.mxu0 0.0
    %426 = vmatprep.subr.mxu0 0.0
    %427 = vmatpush1.msra.mxu0 0.0
    %428 = vmatprep.subr.mxu0 0.0
    %429 = vmatpush1.msra.mxu0 0.0
    %430 = vmatprep.subr.mxu0 0.0
    %431 = vmatpush1.msra.mxu0 0.0
    %432 = vmatprep.subr.mxu0 0.0
    %433 = vmatpush1.msra.mxu0 0.0
    %434 = vmatprep.subr.mxu0 0.0
    %435 = vmatpush1.msra.mxu0 0.0
    %436 = vmatprep.subr.mxu0 0.0
    %437 = vmatpush1.msra.mxu0 0.0
    %438 = vmatprep.subr.mxu0 0.0
    %439 = vmatpush1.msra.mxu0 0.0
    %440 = vmatprep.subr.mxu0 0.0
    %441 = vmatpush1.msra.mxu0 0.0
    %442 = vmatprep.subr.mxu0 0.0
    %443 = vmatpush1.msra.mxu0 0.0
    %444 = vmatprep.mubr.f32.mxu0 0.0
    %445 = vmatmul.mubr.f32.gmra.mrb[0].mxu0 %v54
    %v446 = vpop.f32.mrb[0].mxu0
    %v447 = vadd.f32 %v205, %v446
    %v448 = vpop.f32.mrb[0].mxu0
    %v449 = vadd.f32 %v209, %v448
    %450 = vmatprep.mubr.f32.mxu0 0.0
    %451 = vmatmul.mubr.f32.gmra.mrb[0].mxu0 %v55
    %v452 = vpop.f32.mrb[0].mxu0
    %v453 = vadd.f32 %v205, %v452
    %v454 = vpop.f32.mrb[0].mxu0
    %v455 = vadd.f32 %v209, %v454
    %456 = vdwg.mxu0
    %457 = vmatprep.subr.mxu0 %v63
    %458 = vmatpush1.msra.mxu0 %v62
    %459 = vmatprep.subr.mxu0 %v71
    %460 = vmatpush1.msra.mxu0 %v70
    %461 = vmatprep.subr.mxu0 %v79
    %462 = vmatpush1.msra.mxu0 %v78
    %463 = vmatprep.subr.mxu0 %v87
    %464 = vmatpush1.msra.mxu0 %v86
    %465 = vmatprep.subr.mxu0 %v95
    %466 = vmatpush1.msra.mxu0 %v94
    %467 = vmatprep.subr.mxu0 %v103
    %468 = vmatpush1.msra.mxu0 %v102
    %469 = vmatprep.subr.mxu0 %v111
    %470 = vmatpush1.msra.mxu0 %v110
    %471 = vmatprep.subr.mxu0 %v119
    %472 = vmatpush1.msra.mxu0 %v118
    %473 = vmatprep.subr.mxu0 %v127
    %474 = vmatpush1.msra.mxu0 %v126
    %475 = vmatprep.subr.mxu0 %v135
    %476 = vmatpush1.msra.mxu0 %v134
    %477 = vmatprep.subr.mxu0 %v143
    %478 = vmatpush1.msra.mxu0 %v142
    %479 = vmatprep.subr.mxu0 %v151
    %480 = vmatpush1.msra.mxu0 %v150
    %481 = vmatprep.subr.mxu0 %v159
    %482 = vmatpush1.msra.mxu0 %v158
    %483 = vmatprep.subr.mxu0 %v167
    %484 = vmatpush1.msra.mxu0 %v166
    %485 = vmatprep.subr.mxu0 %v175
    %486 = vmatpush1.msra.mxu0 %v174
    %487 = vmatprep.subr.mxu0 %v183
    %488 = vmatpush1.msra.mxu0 %v182
    %489 = vmatprep.subr.mxu0 0.0
    %490 = vmatpush1.msra.mxu0 0.0
    %491 = vmatprep.subr.mxu0 0.0
    %492 = vmatpush1.msra.mxu0 0.0
    %493 = vmatprep.subr.mxu0 0.0
    %494 = vmatpush1.msra.mxu0 0.0
    %495 = vmatprep.subr.mxu0 0.0
    %496 = vmatpush1.msra.mxu0 0.0
    %497 = vmatprep.subr.mxu0 0.0
    %498 = vmatpush1.msra.mxu0 0.0
    %499 = vmatprep.subr.mxu0 0.0
    %500 = vmatpush1.msra.mxu0 0.0
    %501 = vmatprep.subr.mxu0 0.0
    %502 = vmatpush1.msra.mxu0 0.0
    %503 = vmatprep.subr.mxu0 0.0
    %504 = vmatpush1.msra.mxu0 0.0
    %505 = vmatprep.subr.mxu0 0.0
    %506 = vmatpush1.msra.mxu0 0.0
    %507 = vmatprep.subr.mxu0 0.0
    %508 = vmatpush1.msra.mxu0 0.0
    %509 = vmatprep.subr.mxu0 0.0
    %510 = vmatpush1.msra.mxu0 0.0
    %511 = vmatprep.subr.mxu0 0.0
    %512 = vmatpush1.msra.mxu0 0.0
    %513 = vmatprep.subr.mxu0 0.0
    %514 = vmatpush1.msra.mxu0 0.0
    %515 = vmatprep.subr.mxu0 0.0
    %516 = vmatpush1.msra.mxu0 0.0
    %517 = vmatprep.subr.mxu0 0.0
    %518 = vmatpush1.msra.mxu0 0.0
    %519 = vmatprep.subr.mxu0 0.0
    %520 = vmatpush1.msra.mxu0 0.0
    %521 = vmatprep.mubr.f32.mxu0 0.0
    %522 = vmatmul.mubr.f32.gmra.mrb[0].mxu0 %v54
    %v523 = vpop.f32.mrb[0].mxu0
    %v524 = vadd.f32 %v213, %v523
    %v525 = vpop.f32.mrb[0].mxu0
    %v526 = vadd.f32 %v217, %v525
    %527 = vmatprep.mubr.f32.mxu0 0.0
    %528 = vmatmul.mubr.f32.gmra.mrb[0].mxu0 %v55
    %v529 = vpop.f32.mrb[0].mxu0
    %v530 = vadd.f32 %v213, %v529
    %v531 = vpop.f32.mrb[0].mxu0
    %v532 = vadd.f32 %v217, %v531
    %533 = vdwg.mxu0
    %534 = vst [vmem:[#allocation8] sm:$0xff] %v293
    %535 = vst [vmem:[#allocation8 + $0x8] sm:$0xff] %v295
    %536 = vst [vmem:[#allocation8 + $0x10] sm:$0xff] %v370
    %537 = vst [vmem:[#allocation8 + $0x18] sm:$0xff] %v372
    %538 = vst [vmem:[#allocation8 + $0x20] sm:$0xff] %v447
    %539 = vst [vmem:[#allocation8 + $0x28] sm:$0xff] %v449
    %540 = vst [vmem:[#allocation8 + $0x30] sm:$0xff] %v524
    %541 = vst [vmem:[#allocation8 + $0x38] sm:$0xff] %v526
    %542 = vst [vmem:[#allocation8 + $0x40] sm:$0xff] %v299
    %543 = vst [vmem:[#allocation8 + $0x48] sm:$0xff] %v301
    %544 = vst [vmem:[#allocation8 + $0x50] sm:$0xff] %v376
    %545 = vst [vmem:[#allocation8 + $0x58] sm:$0xff] %v378
    %546 = vst [vmem:[#allocation8 + $0x60] sm:$0xff] %v453
    %547 = vst [vmem:[#allocation8 + $0x68] sm:$0xff] %v455
    %548 = vst [vmem:[#allocation8 + $0x70] sm:$0xff] %v530
    %549 = vst [vmem:[#allocation8 + $0x78] sm:$0xff] %v532
    // Predicated region
    $region26: #{tpu_custom_call.1} parent=1 // pred_check
      _
    $region27: #{tpu_custom_call.1} parent=1 // pred_check_branch
      %551 = sbr.rel (0) target = $region29
    $region28: #{tpu_custom_call.1} parent=1 // pred_region
      %s553 = ssub.s32 2048, 2048
      %554 = vsyncadd [#allocation4], %s553
      %s555 = sshll.u32 [#allocation8], 4
      %s556 = int_to_ptr.vmem [resolvable:$true] %s555
      %561 = dma.vmem_to_hbm [thread:$0]  %s556, 2048, %s3, [#allocation4], 1024, 1024, 64
    $region29: #{tpu_custom_call.1} parent=1 // pred_fallthru
      _
    // Predicated region
    $region30: #{tpu_custom_call.1} parent=1 // pred_check
      _
    $region31: #{tpu_custom_call.1} parent=1 // pred_check_branch
      %563 = sbr.rel (0) target = $region33
    $region32: #{tpu_custom_call.1} parent=1 // pred_region
      %564 = dma.done [#allocation4], 2048
    $region33: #{tpu_custom_call.1} parent=1 // pred_fallthru
      _
    %565 = vsyncpa [#allocation3], 1
    %566 = vsyncpa [#allocation6], 1
    %567 = vsyncpa [#allocation4], 1

// kernel: tpu_custom_call.1
$region0: #{tpu_custom_call.1}
  #allocation0 [shape = 'u32[]', space=smem, size = 0x4, offset = 0x4, fixed_abs, tag = 'smem constant byte address 0x4 - core index']
  #allocation1 [shape = 'u32[144,128]{1,0:T(1,128)}', space=vmem, size = 0x12000, scoped, tag = 'internal scratch']
  %s0 = inlined_call_operand.hbm [shape: f32[16,128], index: 0, kind: input, shape index: {}]
  %s1 = inlined_call_operand.hbm [shape: f32[128,1024], index: 1, kind: input, shape index: {}]
  %s2 = inlined_call_operand.hbm [shape: f32[1,1024], index: 2, kind: input, shape index: {}]
  %s3 = inlined_call_operand.hbm [shape: f32[16,1024], index: 3, kind: output, shape index: {}]
  %s4 = sld [smem:[#allocation0]]
  $region34: #{tpu_custom_call.1} parent=0
    _
  %s6 = ssub.s32 1, %s4
  %s7 = scalar_select 0, %s6, %s4
  $region1: #{tpu_custom_call.1} parent=0
    #allocation2 [shape = 'u8[8192]{0}', space=vmem, size = 0x2000, scoped, tag = 'input window, operand 0, single buffered']
    #allocation3 [shape = 's32[1]{0}', space=sflag, size = 0x4, scoped, tag = 'scoped memory for tpu_custom_call.1']
    #allocation4 [shape = 's32[1]{0}', space=sflag, size = 0x4, scoped, tag = 'scoped memory for tpu_custom_call.1']
    #allocation5 [shape = 'u8[524288]{0}', space=vmem, size = 0x80000, scoped, tag = 'input window, operand 1, single buffered']
    #allocation6 [shape = 's32[1]{0}', space=sflag, size = 0x4, scoped, tag = 'scoped memory for tpu_custom_call.1']
    #allocation7 [shape = 'u8[4096]{0}', space=vmem, size = 0x1000, scoped, tag = 'input window, operand 2, single buffered']
    #allocation8 [shape = 'u8[65536]{0}', space=vmem, size = 0x10000, scoped, tag = 'output window, operand 0, single buffered']
    %8 = vsyncpa [#allocation3], 0
    %9 = vsyncpa [#allocation6], 0
    %10 = vsyncpa [#allocation4], 0
    // Predicated region
    $region2: #{tpu_custom_call.1} parent=1 // pred_check
      _
    $region3: #{tpu_custom_call.1} parent=1 // pred_check_branch
      %12 = sbr.rel (0) target = $region5
    $region4: #{tpu_custom_call.1} parent=1 // pred_region
      %s14 = ssub.s32 256, 256
      %15 = vsyncadd [#allocation3], %s14
      %s16 = sshll.u32 [#allocation2], 4
      %s17 = int_to_ptr.vmem [resolvable:$true] %s16
      %22 = dma.hbm_to_vmem [thread:$0]  %s0, 256, %s17, [#allocation3], 128, 128, 8
    $region5: #{tpu_custom_call.1} parent=1 // pred_fallthru
      _
    // Predicated region
    $region6: #{tpu_custom_call.1} parent=1 // pred_check
      _
    $region7: #{tpu_custom_call.1} parent=1 // pred_check_branch
      %24 = sbr.rel (0) target = $region9
    $region8: #{tpu_custom_call.1} parent=1 // pred_region
      %s26 = ssub.s32 16384, 16384
      %27 = vsyncadd [#allocation6], %s26
      %s28 = sshll.u32 [#allocation5], 4
      %s29 = int_to_ptr.vmem [resolvable:$true] %s28
      %34 = dma.hbm_to_vmem [thread:$0]  %s1, 16384, %s29, [#allocation6], 1024, 1024, 64
    $region9: #{tpu_custom_call.1} parent=1 // pred_fallthru
      _
    // Predicated region
    $region10: #{tpu_custom_call.1} parent=1 // pred_check
      _
    $region11: #{tpu_custom_call.1} parent=1 // pred_check_branch
      %36 = sbr.rel (0) target = $region13
    $region12: #{tpu_custom_call.1} parent=1 // pred_region
      %s38 = ssub.s32 128, 128
      %39 = vsyncadd [#allocation6], %s38
      %s41 = sshll.u32 [#allocation7], 4
      %s42 = int_to_ptr.vmem [resolvable:$true] %s41
      %44 = dma.hbm_to_vmem [thread:$0]  %s2, 128, %s42, [#allocation6]
    $region13: #{tpu_custom_call.1} parent=1 // pred_fallthru
      _
    // Predicated region
    $region14: #{tpu_custom_call.1} parent=1 // pred_check
      _
    $region15: #{tpu_custom_call.1} parent=1 // pred_check_branch
      %46 = sbr.rel (0) target = $region17
    $region16: #{tpu_custom_call.1} parent=1 // pred_region
      %47 = dma.done [#allocation3], 256
    $region17: #{tpu_custom_call.1} parent=1 // pred_fallthru
      _
    // Predicated region
    $region18: #{tpu_custom_call.1} parent=1 // pred_check
      _
    $region19: #{tpu_custom_call.1} parent=1 // pred_check_branch
      %49 = sbr.rel (0) target = $region21
    $region20: #{tpu_custom_call.1} parent=1 // pred_region
      %50 = dma.done [#allocation6], 16384
    $region21: #{tpu_custom_call.1} parent=1 // pred_fallthru
      _
    // Predicated region
    $region22: #{tpu_custom_call.1} parent=1 // pred_check
      _
    $region23: #{tpu_custom_call.1} parent=1 // pred_check_branch
      %52 = sbr.rel (0) target = $region25
    $region24: #{tpu_custom_call.1} parent=1 // pred_region
      %53 = dma.done [#allocation6], 128
    $region25: #{tpu_custom_call.1} parent=1 // pred_fallthru
      _
    %v54 = vld [vmem:[#allocation2] sm:$0xff]
    %v55 = vld [vmem:[#allocation2 + $0x8] sm:$0xff]
    %v56 = vld [vmem:[#allocation5] sm:$0xff]
    %v57 = vld [vmem:[#allocation5 + $0x8] sm:$0xff]
    %v58 = vld [vmem:[#allocation5 + $0x10] sm:$0xff]
    %v59 = vld [vmem:[#allocation5 + $0x18] sm:$0xff]
    %v60 = vld [vmem:[#allocation5 + $0x20] sm:$0xff]
    %v61 = vld [vmem:[#allocation5 + $0x28] sm:$0xff]
    %v62 = vld [vmem:[#allocation5 + $0x30] sm:$0xff]
    %v63 = vld [vmem:[#allocation5 + $0x38] sm:$0xff]
    %v64 = vld [vmem:[#allocation5 + $0x40] sm:$0xff]
    %v65 = vld [vmem:[#allocation5 + $0x48] sm:$0xff]
    %v66 = vld [vmem:[#allocation5 + $0x50] sm:$0xff]
    %v67 = vld [vmem:[#allocation5 + $0x58] sm:$0xff]
    %v68 = vld [vmem:[#allocation5 + $0x60] sm:$0xff]
    %v69 = vld [vmem:[#allocation5 + $0x68] sm:$0xff]
    %v70 = vld [vmem:[#allocation5 + $0x70] sm:$0xff]
    %v71 = vld [vmem:[#allocation5 + $0x78] sm:$0xff]
    %v72 = vld [vmem:[#allocation5 + $0x80] sm:$0xff]
    %v73 = vld [vmem:[#allocation5 + $0x88] sm:$0xff]
    %v74 = vld [vmem:[#allocation5 + $0x90] sm:$0xff]
    %v75 = vld [vmem:[#allocation5 + $0x98] sm:$0xff]
    %v76 = vld [vmem:[#allocation5 + $0xa0] sm:$0xff]
    %v77 = vld [vmem:[#allocation5 + $0xa8] sm:$0xff]
    %v78 = vld [vmem:[#allocation5 + $0xb0] sm:$0xff]
    %v79 = vld [vmem:[#allocation5 + $0xb8] sm:$0xff]
    %v80 = vld [vmem:[#allocation5 + $0xc0] sm:$0xff]
    %v81 = vld [vmem:[#allocation5 + $0xc8] sm:$0xff]
    %v82 = vld [vmem:[#allocation5 + $0xd0] sm:$0xff]
    %v83 = vld [vmem:[#allocation5 + $0xd8] sm:$0xff]
    %v84 = vld [vmem:[#allocation5 + $0xe0] sm:$0xff]
    %v85 = vld [vmem:[#allocation5 + $0xe8] sm:$0xff]
    %v86 = vld [vmem:[#allocation5 + $0xf0] sm:$0xff]
    %v87 = vld [vmem:[#allocation5 + $0xf8] sm:$0xff]
    %v88 = vld [vmem:[#allocation5 + $0x100] sm:$0xff]
    %v89 = vld [vmem:[#allocation5 + $0x108] sm:$0xff]
    %v90 = vld [vmem:[#allocation5 + $0x110] sm:$0xff]
    %v91 = vld [vmem:[#allocation5 + $0x118] sm:$0xff]
    %v92 = vld [vmem:[#allocation5 + $0x120] sm:$0xff]
    %v93 = vld [vmem:[#allocation5 + $0x128] sm:$0xff]
    %v94 = vld [vmem:[#allocation5 + $0x130] sm:$0xff]
    %v95 = vld [vmem:[#allocation5 + $0x138] sm:$0xff]
    %v96 = vld [vmem:[#allocation5 + $0x140] sm:$0xff]
    %v97 = vld [vmem:[#allocation5 + $0x148] sm:$0xff]
    %v98 = vld [vmem:[#allocation5 + $0x150] sm:$0xff]
    %v99 = vld [vmem:[#allocation5 + $0x158] sm:$0xff]
    %v100 = vld [vmem:[#allocation5 + $0x160] sm:$0xff]
    %v101 = vld [vmem:[#allocation5 + $0x168] sm:$0xff]
    %v102 = vld [vmem:[#allocation5 + $0x170] sm:$0xff]
    %v103 = vld [vmem:[#allocation5 + $0x178] sm:$0xff]
    %v104 = vld [vmem:[#allocation5 + $0x180] sm:$0xff]
    %v105 = vld [vmem:[#allocation5 + $0x188] sm:$0xff]
    %v106 = vld [vmem:[#allocation5 + $0x190] sm:$0xff]
    %v107 = vld [vmem:[#allocation5 + $0x198] sm:$0xff]
    %v108 = vld [vmem:[#allocation5 + $0x1a0] sm:$0xff]
    %v109 = vld [vmem:[#allocation5 + $0x1a8] sm:$0xff]
    %v110 = vld [vmem:[#allocation5 + $0x1b0] sm:$0xff]
    %v111 = vld [vmem:[#allocation5 + $0x1b8] sm:$0xff]
    %v112 = vld [vmem:[#allocation5 + $0x1c0] sm:$0xff]
    %v113 = vld [vmem:[#allocation5 + $0x1c8] sm:$0xff]
    %v114 = vld [vmem:[#allocation5 + $0x1d0] sm:$0xff]
    %v115 = vld [vmem:[#allocation5 + $0x1d8] sm:$0xff]
    %v116 = vld [vmem:[#allocation5 + $0x1e0] sm:$0xff]
    %v117 = vld [vmem:[#allocation5 + $0x1e8] sm:$0xff]
    %v118 = vld [vmem:[#allocation5 + $0x1f0] sm:$0xff]
    %v119 = vld [vmem:[#allocation5 + $0x1f8] sm:$0xff]
    %v120 = vld [vmem:[#allocation5 + $0x200] sm:$0xff]
    %v121 = vld [vmem:[#allocation5 + $0x208] sm:$0xff]
    %v122 = vld [vmem:[#allocation5 + $0x210] sm:$0xff]
    %v123 = vld [vmem:[#allocation5 + $0x218] sm:$0xff]
    %v124 = vld [vmem:[#allocation5 + $0x220] sm:$0xff]
    %v125 = vld [vmem:[#allocation5 + $0x228] sm:$0xff]
    %v126 = vld [vmem:[#allocation5 + $0x230] sm:$0xff]
    %v127 = vld [vmem:[#allocation5 + $0x238] sm:$0xff]
    %v128 = vld [vmem:[#allocation5 + $0x240] sm:$0xff]
    %v129 = vld [vmem:[#allocation5 + $0x248] sm:$0xff]
    %v130 = vld [vmem:[#allocation5 + $0x250] sm:$0xff]
    %v131 = vld [vmem:[#allocation5 + $0x258] sm:$0xff]
    %v132 = vld [vmem:[#allocation5 + $0x260] sm:$0xff]
    %v133 = vld [vmem:[#allocation5 + $0x268] sm:$0xff]
    %v134 = vld [vmem:[#allocation5 + $0x270] sm:$0xff]
    %v135 = vld [vmem:[#allocation5 + $0x278] sm:$0xff]
    %v136 = vld [vmem:[#allocation5 + $0x280] sm:$0xff]
    %v137 = vld [vmem:[#allocation5 + $0x288] sm:$0xff]
    %v138 = vld [vmem:[#allocation5 + $0x290] sm:$0xff]
    %v139 = vld [vmem:[#allocation5 + $0x298] sm:$0xff]
    %v140 = vld [vmem:[#allocation5 + $0x2a0] sm:$0xff]
    %v141 = vld [vmem:[#allocation5 + $0x2a8] sm:$0xff]
    %v142 = vld [vmem:[#allocation5 + $0x2b0] sm:$0xff]
    %v143 = vld [vmem:[#allocation5 + $0x2b8] sm:$0xff]
    %v144 = vld [vmem:[#allocation5 + $0x2c0] sm:$0xff]
    %v145 = vld [vmem:[#allocation5 + $0x2c8] sm:$0xff]
    %v146 = vld [vmem:[#allocation5 + $0x2d0] sm:$0xff]
    %v147 = vld [vmem:[#allocation5 + $0x2d8] sm:$0xff]
    %v148 = vld [vmem:[#allocation5 + $0x2e0] sm:$0xff]
    %v149 = vld [vmem:[#allocation5 + $0x2e8] sm:$0xff]
    %v150 = vld [vmem:[#allocation5 + $0x2f0] sm:$0xff]
    %v151 = vld [vmem:[#allocation5 + $0x2f8] sm:$0xff]
    %v152 = vld [vmem:[#allocation5 + $0x300] sm:$0xff]
    %v153 = vld [vmem:[#allocation5 + $0x308] sm:$0xff]
    %v154 = vld [vmem:[#allocation5 + $0x310] sm:$0xff]
    %v155 = vld [vmem:[#allocation5 + $0x318] sm:$0xff]
    %v156 = vld [vmem:[#allocation5 + $0x320] sm:$0xff]
    %v157 = vld [vmem:[#allocation5 + $0x328] sm:$0xff]
    %v158 = vld [vmem:[#allocation5 + $0x330] sm:$0xff]
    %v159 = vld [vmem:[#allocation5 + $0x338] sm:$0xff]
    %v160 = vld [vmem:[#allocation5 + $0x340] sm:$0xff]
    %v161 = vld [vmem:[#allocation5 + $0x348] sm:$0xff]
    %v162 = vld [vmem:[#allocation5 + $0x350] sm:$0xff]
    %v163 = vld [vmem:[#allocation5 + $0x358] sm:$0xff]
    %v164 = vld [vmem:[#allocation5 + $0x360] sm:$0xff]
    %v165 = vld [vmem:[#allocation5 + $0x368] sm:$0xff]
    %v166 = vld [vmem:[#allocation5 + $0x370] sm:$0xff]
    %v167 = vld [vmem:[#allocation5 + $0x378] sm:$0xff]
    %v168 = vld [vmem:[#allocation5 + $0x380] sm:$0xff]
    %v169 = vld [vmem:[#allocation5 + $0x388] sm:$0xff]
    %v170 = vld [vmem:[#allocation5 + $0x390] sm:$0xff]
    %v171 = vld [vmem:[#allocation5 + $0x398] sm:$0xff]
    %v172 = vld [vmem:[#allocation5 + $0x3a0] sm:$0xff]
    %v173 = vld [vmem:[#allocation5 + $0x3a8] sm:$0xff]
    %v174 = vld [vmem:[#allocation5 + $0x3b0] sm:$0xff]
    %v175 = vld [vmem:[#allocation5 + $0x3b8] sm:$0xff]
    %v176 = vld [vmem:[#allocation5 + $0x3c0] sm:$0xff]
    %v177 = vld [vmem:[#allocation5 + $0x3c8] sm:$0xff]
    %v178 = vld [vmem:[#allocation5 + $0x3d0] sm:$0xff]
    %v179 = vld [vmem:[#allocation5 + $0x3d8] sm:$0xff]
    %v180 = vld [vmem:[#allocation5 + $0x3e0] sm:$0xff]
    %v181 = vld [vmem:[#allocation5 + $0x3e8] sm:$0xff]
    %v182 = vld [vmem:[#allocation5 + $0x3f0] sm:$0xff]
    %v183 = vld [vmem:[#allocation5 + $0x3f8] sm:$0xff]
    %v184 = vld [vmem:[#allocation7] sm:$0xff]
    %v186 = vlaneseq
    %v187 = vshrl.u32 %v186, 7
    %v188 = vsub.s32 0, %v187
    %v189 = vrot.slane %v184, %v188
    %v190 = vlaneseq
    %v191 = vshrl.u32 %v190, 7
    %v192 = vsub.s32 1, %v191
    %v193 = vrot.slane %v184, %v192
    %v194 = vlaneseq
    %v195 = vshrl.u32 %v194, 7
    %v196 = vsub.s32 2, %v195
    %v197 = vrot.slane %v184, %v196
    %v198 = vlaneseq
    %v199 = vshrl.u32 %v198, 7
    %v200 = vsub.s32 3, %v199
    %v201 = vrot.slane %v184, %v200
    %v202 = vlaneseq
    %v203 = vshrl.u32 %v202, 7
    %v204 = vsub.s32 4, %v203
    %v205 = vrot.slane %v184, %v204
    %v206 = vlaneseq
    %v207 = vshrl.u32 %v206, 7
    %v208 = vsub.s32 5, %v207
    %v209 = vrot.slane %v184, %v208
    %v210 = vlaneseq
    %v211 = vshrl.u32 %v210, 7
    %v212 = vsub.s32 6, %v211
    %v213 = vrot.slane %v184, %v212
    %v214 = vlaneseq
    %v215 = vshrl.u32 %v214, 7
    %v216 = vsub.s32 7, %v215
    %v217 = vrot.slane %v184, %v216
    %226 = vmatprep.subr.mxu0 %v57
    %227 = vmatpush1.msra.mxu0 %v56
    %228 = vmatprep.subr.mxu0 %v65
    %229 = vmatpush1.msra.mxu0 %v64
    %230 = vmatprep.subr.mxu0 %v73
    %231 = vmatpush1.msra.mxu0 %v72
    %232 = vmatprep.subr.mxu0 %v81
    %233 = vmatpush1.msra.mxu0 %v80
    %234 = vmatprep.subr.mxu0 %v89
    %235 = vmatpush1.msra.mxu0 %v88
    %236 = vmatprep.subr.mxu0 %v97
    %237 = vmatpush1.msra.mxu0 %v96
    %238 = vmatprep.subr.mxu0 %v105
    %239 = vmatpush1.msra.mxu0 %v104
    %240 = vmatprep.subr.mxu0 %v113
    %241 = vmatpush1.msra.mxu0 %v112
    %242 = vmatprep.subr.mxu0 %v121
    %243 = vmatpush1.msra.mxu0 %v120
    %244 = vmatprep.subr.mxu0 %v129
    %245 = vmatpush1.msra.mxu0 %v128
    %246 = vmatprep.subr.mxu0 %v137
    %247 = vmatpush1.msra.mxu0 %v136
    %248 = vmatprep.subr.mxu0 %v145
    %249 = vmatpush1.msra.mxu0 %v144
    %250 = vmatprep.subr.mxu0 %v153
    %251 = vmatpush1.msra.mxu0 %v152
    %252 = vmatprep.subr.mxu0 %v161
    %253 = vmatpush1.msra.mxu0 %v160
    %254 = vmatprep.subr.mxu0 %v169
    %255 = vmatpush1.msra.mxu0 %v168
    %256 = vmatprep.subr.mxu0 %v177
    %257 = vmatpush1.msra.mxu0 %v176
    %258 = vmatprep.subr.mxu0 0.0
    %259 = vmatpush1.msra.mxu0 0.0
    %260 = vmatprep.subr.mxu0 0.0
    %261 = vmatpush1.msra.mxu0 0.0
    %262 = vmatprep.subr.mxu0 0.0
    %263 = vmatpush1.msra.mxu0 0.0
    %264 = vmatprep.subr.mxu0 0.0
    %265 = vmatpush1.msra.mxu0 0.0
    %266 = vmatprep.subr.mxu0 0.0
    %267 = vmatpush1.msra.mxu0 0.0
    %268 = vmatprep.subr.mxu0 0.0
    %269 = vmatpush1.msra.mxu0 0.0
    %270 = vmatprep.subr.mxu0 0.0
    %271 = vmatpush1.msra.mxu0 0.0
    %272 = vmatprep.subr.mxu0 0.0
    %273 = vmatpush1.msra.mxu0 0.0
    %274 = vmatprep.subr.mxu0 0.0
    %275 = vmatpush1.msra.mxu0 0.0
    %276 = vmatprep.subr.mxu0 0.0
    %277 = vmatpush1.msra.mxu0 0.0
    %278 = vmatprep.subr.mxu0 0.0
    %279 = vmatpush1.msra.mxu0 0.0
    %280 = vmatprep.subr.mxu0 0.0
    %281 = vmatpush1.msra.mxu0 0.0
    %282 = vmatprep.subr.mxu0 0.0
    %283 = vmatpush1.msra.mxu0 0.0
    %284 = vmatprep.subr.mxu0 0.0
    %285 = vmatpush1.msra.mxu0 0.0
    %286 = vmatprep.subr.mxu0 0.0
    %287 = vmatpush1.msra.mxu0 0.0
    %288 = vmatprep.subr.mxu0 0.0
    %289 = vmatpush1.msra.mxu0 0.0
    %290 = vmatprep.mubr.f32.mxu0 0.0
    %291 = vmatmul.mubr.f32.gmra.mrb[0].mxu0 %v54
    %v292 = vpop.f32.mrb[0].mxu0
    %v293 = vadd.f32 %v189, %v292
    %v294 = vpop.f32.mrb[0].mxu0
    %v295 = vadd.f32 %v193, %v294
    %296 = vmatprep.mubr.f32.mxu0 0.0
    %297 = vmatmul.mubr.f32.gmra.mrb[0].mxu0 %v55
    %v298 = vpop.f32.mrb[0].mxu0
    %v299 = vadd.f32 %v189, %v298
    %v300 = vpop.f32.mrb[0].mxu0
    %v301 = vadd.f32 %v193, %v300
    %302 = vdwg.mxu0
    %303 = vmatprep.subr.mxu0 %v59
    %304 = vmatpush1.msra.mxu0 %v58
    %305 = vmatprep.subr.mxu0 %v67
    %306 = vmatpush1.msra.mxu0 %v66
    %307 = vmatprep.subr.mxu0 %v75
    %308 = vmatpush1.msra.mxu0 %v74
    %309 = vmatprep.subr.mxu0 %v83
    %310 = vmatpush1.msra.mxu0 %v82
    %311 = vmatprep.subr.mxu0 %v91
    %312 = vmatpush1.msra.mxu0 %v90
    %313 = vmatprep.subr.mxu0 %v99
    %314 = vmatpush1.msra.mxu0 %v98
    %315 = vmatprep.subr.mxu0 %v107
    %316 = vmatpush1.msra.mxu0 %v106
    %317 = vmatprep.subr.mxu0 %v115
    %318 = vmatpush1.msra.mxu0 %v114
    %319 = vmatprep.subr.mxu0 %v123
    %320 = vmatpush1.msra.mxu0 %v122
    %321 = vmatprep.subr.mxu0 %v131
    %322 = vmatpush1.msra.mxu0 %v130
    %323 = vmatprep.subr.mxu0 %v139
    %324 = vmatpush1.msra.mxu0 %v138
    %325 = vmatprep.subr.mxu0 %v147
    %326 = vmatpush1.msra.mxu0 %v146
    %327 = vmatprep.subr.mxu0 %v155
    %328 = vmatpush1.msra.mxu0 %v154
    %329 = vmatprep.subr.mxu0 %v163
    %330 = vmatpush1.msra.mxu0 %v162
    %331 = vmatprep.subr.mxu0 %v171
    %332 = vmatpush1.msra.mxu0 %v170
    %333 = vmatprep.subr.mxu0 %v179
    %334 = vmatpush1.msra.mxu0 %v178
    %335 = vmatprep.subr.mxu0 0.0
    %336 = vmatpush1.msra.mxu0 0.0
    %337 = vmatprep.subr.mxu0 0.0
    %338 = vmatpush1.msra.mxu0 0.0
    %339 = vmatprep.subr.mxu0 0.0
    %340 = vmatpush1.msra.mxu0 0.0
    %341 = vmatprep.subr.mxu0 0.0
    %342 = vmatpush1.msra.mxu0 0.0
    %343 = vmatprep.subr.mxu0 0.0
    %344 = vmatpush1.msra.mxu0 0.0
    %345 = vmatprep.subr.mxu0 0.0
    %346 = vmatpush1.msra.mxu0 0.0
    %347 = vmatprep.subr.mxu0 0.0
    %348 = vmatpush1.msra.mxu0 0.0
    %349 = vmatprep.subr.mxu0 0.0
    %350 = vmatpush1.msra.mxu0 0.0
    %351 = vmatprep.subr.mxu0 0.0
    %352 = vmatpush1.msra.mxu0 0.0
    %353 = vmatprep.subr.mxu0 0.0
    %354 = vmatpush1.msra.mxu0 0.0
    %355 = vmatprep.subr.mxu0 0.0
    %356 = vmatpush1.msra.mxu0 0.0
    %357 = vmatprep.subr.mxu0 0.0
    %358 = vmatpush1.msra.mxu0 0.0
    %359 = vmatprep.subr.mxu0 0.0
    %360 = vmatpush1.msra.mxu0 0.0
    %361 = vmatprep.subr.mxu0 0.0
    %362 = vmatpush1.msra.mxu0 0.0
    %363 = vmatprep.subr.mxu0 0.0
    %364 = vmatpush1.msra.mxu0 0.0
    %365 = vmatprep.subr.mxu0 0.0
    %366 = vmatpush1.msra.mxu0 0.0
    %367 = vmatprep.mubr.f32.mxu0 0.0
    %368 = vmatmul.mubr.f32.gmra.mrb[0].mxu0 %v54
    %v369 = vpop.f32.mrb[0].mxu0
    %v370 = vadd.f32 %v197, %v369
    %v371 = vpop.f32.mrb[0].mxu0
    %v372 = vadd.f32 %v201, %v371
    %373 = vmatprep.mubr.f32.mxu0 0.0
    %374 = vmatmul.mubr.f32.gmra.mrb[0].mxu0 %v55
    %v375 = vpop.f32.mrb[0].mxu0
    %v376 = vadd.f32 %v197, %v375
    %v377 = vpop.f32.mrb[0].mxu0
    %v378 = vadd.f32 %v201, %v377
    %379 = vdwg.mxu0
    %380 = vmatprep.subr.mxu0 %v61
    %381 = vmatpush1.msra.mxu0 %v60
    %382 = vmatprep.subr.mxu0 %v69
    %383 = vmatpush1.msra.mxu0 %v68
    %384 = vmatprep.subr.mxu0 %v77
    %385 = vmatpush1.msra.mxu0 %v76
    %386 = vmatprep.subr.mxu0 %v85
    %387 = vmatpush1.msra.mxu0 %v84
    %388 = vmatprep.subr.mxu0 %v93
    %389 = vmatpush1.msra.mxu0 %v92
    %390 = vmatprep.subr.mxu0 %v101
    %391 = vmatpush1.msra.mxu0 %v100
    %392 = vmatprep.subr.mxu0 %v109
    %393 = vmatpush1.msra.mxu0 %v108
    %394 = vmatprep.subr.mxu0 %v117
    %395 = vmatpush1.msra.mxu0 %v116
    %396 = vmatprep.subr.mxu0 %v125
    %397 = vmatpush1.msra.mxu0 %v124
    %398 = vmatprep.subr.mxu0 %v133
    %399 = vmatpush1.msra.mxu0 %v132
    %400 = vmatprep.subr.mxu0 %v141
    %401 = vmatpush1.msra.mxu0 %v140
    %402 = vmatprep.subr.mxu0 %v149
    %403 = vmatpush1.msra.mxu0 %v148
    %404 = vmatprep.subr.mxu0 %v157
    %405 = vmatpush1.msra.mxu0 %v156
    %406 = vmatprep.subr.mxu0 %v165
    %407 = vmatpush1.msra.mxu0 %v164
    %408 = vmatprep.subr.mxu0 %v173
    %409 = vmatpush1.msra.mxu0 %v172
    %410 = vmatprep.subr.mxu0 %v181
    %411 = vmatpush1.msra.mxu0 %v180
    %412 = vmatprep.subr.mxu0 0.0
    %413 = vmatpush1.msra.mxu0 0.0
    %414 = vmatprep.subr.mxu0 0.0
    %415 = vmatpush1.msra.mxu0 0.0
    %416 = vmatprep.subr.mxu0 0.0
    %417 = vmatpush1.msra.mxu0 0.0
    %418 = vmatprep.subr.mxu0 0.0
    %419 = vmatpush1.msra.mxu0 0.0
    %420 = vmatprep.subr.mxu0 0.0
    %421 = vmatpush1.msra.mxu0 0.0
    %422 = vmatprep.subr.mxu0 0.0
    %423 = vmatpush1.msra.mxu0 0.0
    %424 = vmatprep.subr.mxu0 0.0
    %425 = vmatpush1.msra.mxu0 0.0
    %426 = vmatprep.subr.mxu0 0.0
    %427 = vmatpush1.msra.mxu0 0.0
    %428 = vmatprep.subr.mxu0 0.0
    %429 = vmatpush1.msra.mxu0 0.0
    %430 = vmatprep.subr.mxu0 0.0
    %431 = vmatpush1.msra.mxu0 0.0
    %432 = vmatprep.subr.mxu0 0.0
    %433 = vmatpush1.msra.mxu0 0.0
    %434 = vmatprep.subr.mxu0 0.0
    %435 = vmatpush1.msra.mxu0 0.0
    %436 = vmatprep.subr.mxu0 0.0
    %437 = vmatpush1.msra.mxu0 0.0
    %438 = vmatprep.subr.mxu0 0.0
    %439 = vmatpush1.msra.mxu0 0.0
    %440 = vmatprep.subr.mxu0 0.0
    %441 = vmatpush1.msra.mxu0 0.0
    %442 = vmatprep.subr.mxu0 0.0
    %443 = vmatpush1.msra.mxu0 0.0
    %444 = vmatprep.mubr.f32.mxu0 0.0
    %445 = vmatmul.mubr.f32.gmra.mrb[0].mxu0 %v54
    %v446 = vpop.f32.mrb[0].mxu0
    %v447 = vadd.f32 %v205, %v446
    %v448 = vpop.f32.mrb[0].mxu0
    %v449 = vadd.f32 %v209, %v448
    %450 = vmatprep.mubr.f32.mxu0 0.0
    %451 = vmatmul.mubr.f32.gmra.mrb[0].mxu0 %v55
    %v452 = vpop.f32.mrb[0].mxu0
    %v453 = vadd.f32 %v205, %v452
    %v454 = vpop.f32.mrb[0].mxu0
    %v455 = vadd.f32 %v209, %v454
    %456 = vdwg.mxu0
    %457 = vmatprep.subr.mxu0 %v63
    %458 = vmatpush1.msra.mxu0 %v62
    %459 = vmatprep.subr.mxu0 %v71
    %460 = vmatpush1.msra.mxu0 %v70
    %461 = vmatprep.subr.mxu0 %v79
    %462 = vmatpush1.msra.mxu0 %v78
    %463 = vmatprep.subr.mxu0 %v87
    %464 = vmatpush1.msra.mxu0 %v86
    %465 = vmatprep.subr.mxu0 %v95
    %466 = vmatpush1.msra.mxu0 %v94
    %467 = vmatprep.subr.mxu0 %v103
    %468 = vmatpush1.msra.mxu0 %v102
    %469 = vmatprep.subr.mxu0 %v111
    %470 = vmatpush1.msra.mxu0 %v110
    %471 = vmatprep.subr.mxu0 %v119
    %472 = vmatpush1.msra.mxu0 %v118
    %473 = vmatprep.subr.mxu0 %v127
    %474 = vmatpush1.msra.mxu0 %v126
    %475 = vmatprep.subr.mxu0 %v135
    %476 = vmatpush1.msra.mxu0 %v134
    %477 = vmatprep.subr.mxu0 %v143
    %478 = vmatpush1.msra.mxu0 %v142
    %479 = vmatprep.subr.mxu0 %v151
    %480 = vmatpush1.msra.mxu0 %v150
    %481 = vmatprep.subr.mxu0 %v159
    %482 = vmatpush1.msra.mxu0 %v158
    %483 = vmatprep.subr.mxu0 %v167
    %484 = vmatpush1.msra.mxu0 %v166
    %485 = vmatprep.subr.mxu0 %v175
    %486 = vmatpush1.msra.mxu0 %v174
    %487 = vmatprep.subr.mxu0 %v183
    %488 = vmatpush1.msra.mxu0 %v182
    %489 = vmatprep.subr.mxu0 0.0
    %490 = vmatpush1.msra.mxu0 0.0
    %491 = vmatprep.subr.mxu0 0.0
    %492 = vmatpush1.msra.mxu0 0.0
    %493 = vmatprep.subr.mxu0 0.0
    %494 = vmatpush1.msra.mxu0 0.0
    %495 = vmatprep.subr.mxu0 0.0
    %496 = vmatpush1.msra.mxu0 0.0
    %497 = vmatprep.subr.mxu0 0.0
    %498 = vmatpush1.msra.mxu0 0.0
    %499 = vmatprep.subr.mxu0 0.0
    %500 = vmatpush1.msra.mxu0 0.0
    %501 = vmatprep.subr.mxu0 0.0
    %502 = vmatpush1.msra.mxu0 0.0
    %503 = vmatprep.subr.mxu0 0.0
    %504 = vmatpush1.msra.mxu0 0.0
    %505 = vmatprep.subr.mxu0 0.0
    %506 = vmatpush1.msra.mxu0 0.0
    %507 = vmatprep.subr.mxu0 0.0
    %508 = vmatpush1.msra.mxu0 0.0
    %509 = vmatprep.subr.mxu0 0.0
    %510 = vmatpush1.msra.mxu0 0.0
    %511 = vmatprep.subr.mxu0 0.0
    %512 = vmatpush1.msra.mxu0 0.0
    %513 = vmatprep.subr.mxu0 0.0
    %514 = vmatpush1.msra.mxu0 0.0
    %515 = vmatprep.subr.mxu0 0.0
    %516 = vmatpush1.msra.mxu0 0.0
    %517 = vmatprep.subr.mxu0 0.0
    %518 = vmatpush1.msra.mxu0 0.0
    %519 = vmatprep.subr.mxu0 0.0
    %520 = vmatpush1.msra.mxu0 0.0
    %521 = vmatprep.mubr.f32.mxu0 0.0
    %522 = vmatmul.mubr.f32.gmra.mrb[0].mxu0 %v54
    %v523 = vpop.f32.mrb[0].mxu0
    %v524 = vadd.f32 %v213, %v523
    %v525 = vpop.f32.mrb[0].mxu0
    %v526 = vadd.f32 %v217, %v525
    %527 = vmatprep.mubr.f32.mxu0 0.0
    %528 = vmatmul.mubr.f32.gmra.mrb[0].mxu0 %v55
    %v529 = vpop.f32.mrb[0].mxu0
    %v530 = vadd.f32 %v213, %v529
    %v531 = vpop.f32.mrb[0].mxu0
    %v532 = vadd.f32 %v217, %v531
    %533 = vdwg.mxu0
    %534 = vst [vmem:[#allocation8] sm:$0xff] %v293
    %535 = vst [vmem:[#allocation8 + $0x8] sm:$0xff] %v295
    %536 = vst [vmem:[#allocation8 + $0x10] sm:$0xff] %v370
    %537 = vst [vmem:[#allocation8 + $0x18] sm:$0xff] %v372
    %538 = vst [vmem:[#allocation8 + $0x20] sm:$0xff] %v447
    %539 = vst [vmem:[#allocation8 + $0x28] sm:$0xff] %v449
    %540 = vst [vmem:[#allocation8 + $0x30] sm:$0xff] %v524
    %541 = vst [vmem:[#allocation8 + $0x38] sm:$0xff] %v526
    %542 = vst [vmem:[#allocation8 + $0x40] sm:$0xff] %v299
    %543 = vst [vmem:[#allocation8 + $0x48] sm:$0xff] %v301
    %544 = vst [vmem:[#allocation8 + $0x50] sm:$0xff] %v376
    %545 = vst [vmem:[#allocation8 + $0x58] sm:$0xff] %v378
    %546 = vst [vmem:[#allocation8 + $0x60] sm:$0xff] %v453
    %547 = vst [vmem:[#allocation8 + $0x68] sm:$0xff] %v455
    %548 = vst [vmem:[#allocation8 + $0x70] sm:$0xff] %v530
    %549 = vst [vmem:[#allocation8 + $0x78] sm:$0xff] %v532
    // Predicated region
    $region26: #{tpu_custom_call.1} parent=1 // pred_check
      _
    $region27: #{tpu_custom_call.1} parent=1 // pred_check_branch
      %551 = sbr.rel (0) target = $region29
    $region28: #{tpu_custom_call.1} parent=1 // pred_region
      %s553 = ssub.s32 2048, 2048
      %554 = vsyncadd [#allocation4], %s553
      %s555 = sshll.u32 [#allocation8], 4
      %s556 = int_to_ptr.vmem [resolvable:$true] %s555
      %561 = dma.vmem_to_hbm [thread:$0]  %s556, 2048, %s3, [#allocation4], 1024, 1024, 64
    $region29: #{tpu_custom_call.1} parent=1 // pred_fallthru
      _
    // Predicated region
    $region30: #{tpu_custom_call.1} parent=1 // pred_check
      _
    $region31: #{tpu_custom_call.1} parent=1 // pred_check_branch
      %563 = sbr.rel (0) target = $region33
    $region32: #{tpu_custom_call.1} parent=1 // pred_region
      %564 = dma.done [#allocation4], 2048
    $region33: #{tpu_custom_call.1} parent=1 // pred_fallthru
      _
    %565 = vsyncpa [#allocation3], 1
    %566 = vsyncpa [#allocation6], 1
    %567 = vsyncpa [#allocation4], 1

</llo_original>
